<compile_context>
chip_gen: v5e
topology: v5e:2x2
jax: 0.10.0
libtpu: 0.0.40
codegen_flags: <defaults>
</compile_context>

<pallas_src>
import functools

import jax
import jax.numpy as jnp
from jax.experimental import pallas as pl
from jax.experimental.pallas import tpu as pltpu


def _relu(v):
    return jnp.maximum(v, 0.0)


def _round_up(v, m):
    return ((v + m - 1) // m) * m


# ---------------------------------------------------------------------------
# Kernel
# ---------------------------------------------------------------------------
def kitnet_kernel(
    x_ref,
    # fused hstack-ensemble params (layer-1 concatenated, layers 2-5 block-diagonal,
    # layer-6 block-diagonal augmented with -tile(I_F) rows)
    w1, b1, w2, b2, w3, b3,
    wd1, bd1, wd2, bd2,
    wd3_aug, bd3,
    seg,                 # [n_aes*F, n_aes] block-indicator matrix
    oae,                 # packed tiny output-AE params [8, maxk, maxn]
    # single lane-packed output slab [TB, n_aes + latent + n_aes]
    out_ref,
    *, n_aes, latent_dim,
):
    x = x_ref[...]                                   # [TB, F] float32

    def mm(a, w_ref):
        return jnp.dot(a, w_ref[...], preferred_element_type=jnp.float32)

    # ---- fused hstack ensemble: 5 matmuls for all n_aes encoders/decoders ----
    h = _relu(mm(x, w1) + b1[...])                   # [TB, n*h1]
    h = _relu(mm(h, w2) + b2[...])                   # [TB, n*h2]
    h = _relu(mm(h, w3) + b3[...])                   # stacked latents (F.relu(z) is a no-op)
    d = _relu(mm(h, wd1) + bd1[...])                 # [TB, n*h2]
    d = _relu(mm(d, wd2) + bd2[...])                 # [TB, n*h1]

    # Last decoder layer with the x-replication folded into the matmul:
    #   [d | x] @ [[blockdiag(wd3)], [-tile(I_F)]] + bd3  =  x_hat - x_rep
    # (sign flip is irrelevant after squaring).  One aligned lane-concat instead of a
    # 5-way replication at unaligned offsets plus a [TB, n*F] subtract.
    aug = jnp.concatenate([d, x], axis=-1)           # [TB, n*h1 + F]
    diff = jnp.dot(aug, wd3_aug[...], preferred_element_type=jnp.float32) + bd3[...]

    # per-AE squared reconstruction error via one MXU contraction with the
    # block-indicator matrix (no XLU reductions, no narrow concat)
    hstack = jnp.dot(diff * diff, seg[...], preferred_element_type=jnp.float32)  # [TB, n_aes]

    # ---- output autoencoder: 4 tiny matmuls on the (idle) MXU ----
    o = oae[...]

    def lin(a, idx, k, n):
        w = o[2 * idx, :k, :n]                       # static slices of the packed slab
        b = o[2 * idx + 1, 0:1, :n]
        return jnp.dot(a, w, preferred_element_type=jnp.float32) + b

    h_o = _relu(lin(hstack, 0, n_aes, 4))
    z = _relu(lin(h_o, 1, 4, latent_dim))            # [TB, latent]
    d_o = _relu(lin(_relu(z), 2, latent_dim, 4))     # decoder(F.relu(z))
    out = lin(d_o, 3, 4, n_aes)                      # [TB, n_aes], no final activation

    # single lane-packed store: [hstack | z | output]
    out_ref[...] = jnp.concatenate([hstack, z, out], axis=-1)


# ---------------------------------------------------------------------------
# One-time parameter fusion (call once at model-load time, NOT per forward step)
# ---------------------------------------------------------------------------
def _block_diag(w_stack):
    """[n, fi, fo] -> [n*fi, n*fo] block-diagonal."""
    n, fi, fo = w_stack.shape
    out = jnp.zeros((n * fi, n * fo), jnp.float32)
    for i in range(n):
        out = out.at[i * fi:(i + 1) * fi, i * fo:(i + 1) * fo].set(w_stack[i])
    return out


def build_fused_params(params, *, n_aes):
    """Turn per-AE stacked params into the fused layout. Run once, cache the result."""
    (he_w1, he_b1, he_w2, he_b2, he_w3, he_b3,
     hd_w1, hd_b1, hd_w2, hd_b2, hd_w3, hd_b3,
     oe_w1, oe_b1, oe_w2, oe_b2,
     od_w1, od_b1, od_w2, od_b2) = params
    in_features = he_w1.shape[1]
    latent_dim = oe_w2.shape[1]

    def cat_out(w):   # [n, in, out] -> [in, n*out]   (layer 1: shared input x)
        return jnp.concatenate([w[i] for i in range(n_aes)], axis=-1)

    def cat_bias(b):  # [n, 1, out] -> [1, n*out]
        return jnp.concatenate([b[i] for i in range(n_aes)], axis=-1)

    # last decoder layer augmented with -tile(I_F): [d | x] @ wd3_aug = x_hat - x_rep
    wd3_bd = _block_diag(hd_w3)                                          # [n*h1, n*F]
    neg_rep_eye = -jnp.tile(jnp.eye(in_features, dtype=jnp.float32), (1, n_aes))  # [F, n*F]
    wd3_aug = jnp.concatenate([wd3_bd, neg_rep_eye], axis=0)             # [n*h1+F, n*F]

    # block-indicator ("segment one-hot") matrix: [n*F, n]
    seg = jnp.repeat(jnp.eye(n_aes, dtype=jnp.float32), in_features, axis=0)

    # pack the 8 tiny output-AE params into one [8, maxk, maxn] slab (one ref / one DMA)
    maxd = _round_up(max(n_aes, 4, latent_dim), 8)

    def pad(a):
        return jnp.zeros((maxd, maxd), jnp.float32).at[:a.shape[0], :a.shape[1]].set(a)

    oae = jnp.stack([pad(oe_w1), pad(oe_b1), pad(oe_w2), pad(oe_b2),
                     pad(od_w1), pad(od_b1), pad(od_w2), pad(od_b2)], axis=0)

    return [
        cat_out(he_w1), cat_bias(he_b1),
        _block_diag(he_w2), cat_bias(he_b2),
        _block_diag(he_w3), cat_bias(he_b3),
        _block_diag(hd_w1), cat_bias(hd_b1),
        _block_diag(hd_w2), cat_bias(hd_b2),
        wd3_aug, cat_bias(hd_b3),
        seg, oae,
    ]


# ---------------------------------------------------------------------------
# Forward wrapper
# ---------------------------------------------------------------------------
def _pick_batch_tile(B, max_tile):
    """Batch tile: single step for small B; otherwise >=2 grid steps (v7x megacore),
    capped at max_tile (footprint at 4096 rows is a few MiB -- far under any VMEM limit)."""
    if B <= 256:
        return B
    return min(max_tile, _round_up(pl.cdiv(B, 2), 8))


def kitnet_forward(x, fused_params, *, n_aes, latent_dim, max_batch_tile=4096):
    """Forward pass. `fused_params` must come from build_fused_params (precomputed once)."""
    B, F = x.shape
    tb = _pick_batch_tile(B, max_batch_tile)
    grid = (pl.cdiv(B, tb),)
    out_w = n_aes + latent_dim + n_aes

    x_spec = pl.BlockSpec((tb, F), lambda i: (i, 0))
    w_specs = [
        pl.BlockSpec(w.shape, functools.partial(lambda i, nd: (0,) * nd, nd=w.ndim))
        for w in fused_params
    ]  # constant index maps -> weights stay VMEM-resident across grid steps
    out_spec = pl.BlockSpec((tb, out_w), lambda i: (i, 0))

    slab = pl.pallas_call(
        functools.partial(kitnet_kernel, n_aes=n_aes, latent_dim=latent_dim),
        out_shape=jax.ShapeDtypeStruct((B, out_w), jnp.float32),
        grid=grid,
        in_specs=[x_spec] + w_specs,
        out_specs=out_spec,
        compiler_params=pltpu.CompilerParams(
            dimension_semantics=("parallel",),       # shards the batch grid across TCs
            vmem_limit_bytes=48 * 1024 * 1024,       # headroom for tb=4096; < v7x 64 MiB
        ),
    )(x, *fused_params)

    hstack = slab[:, :n_aes]
    z = slab[:, n_aes:n_aes + latent_dim]
    output = slab[:, n_aes + latent_dim:]
    return hstack, z, output


# ---------------------------------------------------------------------------
# Parameter init (matches KitNet/AutoEncoder init_normal) and plain-JAX reference
# ---------------------------------------------------------------------------
def init_params(key, in_features, n_aes, latent_dim):
    """Kaiming-normal(fan_out) weights, zero biases. Weights stored pre-transposed [in, out];
    the n_aes hstack autoencoders are stacked along a leading axis."""
    h1 = int(in_features * 0.2)
    h2 = int(in_features * 0.2 * 0.75)
    h3 = int(in_features * 0.2 * 0.5)

    hs_enc_dims = [(in_features, h1), (h1, h2), (h2, h3)]
    hs_dec_dims = [(h3, h2), (h2, h1), (h1, in_features)]
    out_enc_dims = [(n_aes, 4), (4, latent_dim)]
    out_dec_dims = [(latent_dim, 4), (4, n_aes)]

    keys = iter(jax.random.split(key, 32))

    def kaiming(k, fi, fo, stack=None):
        shape = (fi, fo) if stack is None else (stack, fi, fo)
        std = (2.0 / fo) ** 0.5  # kaiming_normal_, mode='fan_out', relu
        return (std * jax.random.normal(k, shape)).astype(jnp.float32)

    params = []
    for fi, fo in hs_enc_dims:
        params.append(kaiming(next(keys), fi, fo, stack=n_aes))
        params.append(jnp.zeros((n_aes, 1, fo), jnp.float32))
    for fi, fo in hs_dec_dims:
        params.append(kaiming(next(keys), fi, fo, stack=n_aes))
        params.append(jnp.zeros((n_aes, 1, fo), jnp.float32))
    for fi, fo in out_enc_dims:
        params.append(kaiming(next(keys), fi, fo))
        params.append(jnp.zeros((1, fo), jnp.float32))
    for fi, fo in out_dec_dims:
        params.append(kaiming(next(keys), fi, fo))
        params.append(jnp.zeros((1, fo), jnp.float32))
    return params


def kitnet_reference(x, params, *, n_aes):
    """Plain-JAX per-AE (unfused) reference of the same forward, for correctness checks."""
    (he_w1, he_b1, he_w2, he_b2, he_w3, he_b3,
     hd_w1, hd_b1, hd_w2, hd_b2, hd_w3, hd_b3,
     oe_w1, oe_b1, oe_w2, oe_b2,
     od_w1, od_b1, od_w2, od_b2) = params
    r = lambda v: jnp.maximum(v, 0.0)
    errs = []
    for i in range(n_aes):
        h = r(x @ he_w1[i] + he_b1[i])
        h = r(h @ he_w2[i] + he_b2[i])
        z_i = r(h @ he_w3[i] + he_b3[i])
        d = r(r(z_i) @ hd_w1[i] + hd_b1[i])
        d = r(d @ hd_w2[i] + hd_b2[i])
        x_hat = d @ hd_w3[i] + hd_b3[i]
        errs.append(jnp.sum((x - x_hat) ** 2, axis=-1, keepdims=True))
    hstack = jnp.concatenate(errs, axis=-1)
    h = r(hstack @ oe_w1 + oe_b1)
    z = r(h @ oe_w2 + oe_b2)
    d = r(r(z) @ od_w1 + od_b1)
    out = d @ od_w2 + od_b2
    return hstack, z, out


if __name__ == "__main__":
    IN_FEATURES = 40       # -> hidden sizes 8, 6, 4 (int(F*0.2), int(F*0.2*0.75), int(F*0.2*0.5))
    N_AES = 5
    LATENT_DIM = 1

    key = jax.random.PRNGKey(0)
    kx, kx2, kp = jax.random.split(key, 3)
    params = init_params(kp, IN_FEATURES, N_AES, LATENT_DIM)

    # Fuse params ONCE at "model load" time (hoisted out of the per-step forward path).
    fused = build_fused_params(params, n_aes=N_AES)
    fused = jax.block_until_ready(fused)

    # --- small batch (single grid step) ---
    B = 8
    x = jax.random.normal(kx, (B, IN_FEATURES), dtype=jnp.float32)
    hstack_out, z, output = kitnet_forward(x, fused, n_aes=N_AES, latent_dim=LATENT_DIM)
    jax.block_until_ready((hstack_out, z, output))

    ref_h, ref_z, ref_o = kitnet_reference(x, params, n_aes=N_AES)
    assert hstack_out.shape == (B, N_AES) and z.shape == (B, LATENT_DIM) and output.shape == (B, N_AES)
    assert jnp.allclose(hstack_out, ref_h, rtol=1e-3, atol=1e-3)
    assert jnp.allclose(z, ref_z, rtol=1e-3, atol=1e-3)
    assert jnp.allclose(output, ref_o, rtol=1e-3, atol=1e-3)

    # --- larger batch (exercises the >=2-step parallel grid / batch tiling path) ---
    B2 = 512
    x2 = jax.random.normal(kx2, (B2, IN_FEATURES), dtype=jnp.float32)
    h2, z2, o2 = kitnet_forward(x2, fused, n_aes=N_AES, latent_dim=LATENT_DIM)
    jax.block_until_ready((h2, z2, o2))
    rh2, rz2, ro2 = kitnet_reference(x2, params, n_aes=N_AES)
    assert jnp.allclose(h2, rh2, rtol=1e-3, atol=1e-3)
    assert jnp.allclose(z2, rz2, rtol=1e-3, atol=1e-3)
    assert jnp.allclose(o2, ro2, rtol=1e-3, atol=1e-3)

    # TODO(synk): latent_center parameters and save/load/training utilities are not part of
    # the forward pass and are not implemented.
    print("KERNEL_OK")
</pallas_src>

<mosaic_0001>
module attributes {stable_mosaic.version = 11 : i64} {
  func.func @kitnet_kernel(%arg0: i32, %arg1: memref<8x40xf32, #tpu.memory_space<vmem>>, %arg2: memref<40x40xf32, #tpu.memory_space<vmem>>, %arg3: memref<1x40xf32, #tpu.memory_space<vmem>>, %arg4: memref<40x30xf32, #tpu.memory_space<vmem>>, %arg5: memref<1x30xf32, #tpu.memory_space<vmem>>, %arg6: memref<30x20xf32, #tpu.memory_space<vmem>>, %arg7: memref<1x20xf32, #tpu.memory_space<vmem>>, %arg8: memref<20x30xf32, #tpu.memory_space<vmem>>, %arg9: memref<1x30xf32, #tpu.memory_space<vmem>>, %arg10: memref<30x40xf32, #tpu.memory_space<vmem>>, %arg11: memref<1x40xf32, #tpu.memory_space<vmem>>, %arg12: memref<80x200xf32, #tpu.memory_space<vmem>>, %arg13: memref<1x200xf32, #tpu.memory_space<vmem>>, %arg14: memref<200x5xf32, #tpu.memory_space<vmem>>, %arg15: memref<8x8x8xf32, #tpu.memory_space<vmem>>, %arg16: memref<8x11xf32, #tpu.memory_space<vmem>>) attributes {dimension_semantics = [#tpu.dimension_semantics<parallel>], iteration_bounds = array<i64: 1>, scalar_prefetch = 0 : i64, scratch_operands = 0 : i64, tpu.core_type = #tpu.core_type<tc>, window_params = [{transform_indices = @transform_0, window_bounds = array<i64: 8, 40>}, {pipeline_mode = #tpu.pipeline_mode<synchronous>, transform_indices = @transform_1, window_bounds = array<i64: 40, 40>}, {pipeline_mode = #tpu.pipeline_mode<synchronous>, transform_indices = @transform_2, window_bounds = array<i64: 1, 40>}, {pipeline_mode = #tpu.pipeline_mode<synchronous>, transform_indices = @transform_3, window_bounds = array<i64: 40, 30>}, {pipeline_mode = #tpu.pipeline_mode<synchronous>, transform_indices = @transform_4, window_bounds = array<i64: 1, 30>}, {pipeline_mode = #tpu.pipeline_mode<synchronous>, transform_indices = @transform_5, window_bounds = array<i64: 30, 20>}, {pipeline_mode = #tpu.pipeline_mode<synchronous>, transform_indices = @transform_6, window_bounds = array<i64: 1, 20>}, {pipeline_mode = #tpu.pipeline_mode<synchronous>, transform_indices = @transform_7, window_bounds = array<i64: 20, 30>}, {pipeline_mode = #tpu.pipeline_mode<synchronous>, transform_indices = @transform_8, window_bounds = array<i64: 1, 30>}, {pipeline_mode = #tpu.pipeline_mode<synchronous>, transform_indices = @transform_9, window_bounds = array<i64: 30, 40>}, {pipeline_mode = #tpu.pipeline_mode<synchronous>, transform_indices = @transform_10, window_bounds = array<i64: 1, 40>}, {pipeline_mode = #tpu.pipeline_mode<synchronous>, transform_indices = @transform_11, window_bounds = array<i64: 80, 200>}, {pipeline_mode = #tpu.pipeline_mode<synchronous>, transform_indices = @transform_12, window_bounds = array<i64: 1, 200>}, {pipeline_mode = #tpu.pipeline_mode<synchronous>, transform_indices = @transform_13, window_bounds = array<i64: 200, 5>}, {pipeline_mode = #tpu.pipeline_mode<synchronous>, transform_indices = @transform_14, window_bounds = array<i64: 8, 8, 8>}, {transform_indices = @transform_15, window_bounds = array<i64: 8, 11>}]} {
    %c0 = arith.constant 0 : index
    %c0_0 = arith.constant 0 : index
    %0 = vector.load %arg1[%c0, %c0_0] : memref<8x40xf32, #tpu.memory_space<vmem>>, vector<8x40xf32>
    %c0_1 = arith.constant 0 : index
    %c0_2 = arith.constant 0 : index
    %1 = vector.load %arg2[%c0_1, %c0_2] : memref<40x40xf32, #tpu.memory_space<vmem>>, vector<40x40xf32>
    %cst = arith.constant dense<0.000000e+00> : vector<8x40xf32>
    %2 = tpu.matmul %0, %1, %cst {dimension_numbers = #tpu.dot_dimension_numbers<[1], [0], [0], [1], [0, 0, 1, 1], [], []>} : vector<8x40xf32>, vector<40x40xf32>, vector<8x40xf32> -> vector<8x40xf32>
    %c0_3 = arith.constant 0 : index
    %c0_4 = arith.constant 0 : index
    %3 = vector.load %arg3[%c0_3, %c0_4] : memref<1x40xf32, #tpu.memory_space<vmem>>, vector<1x40xf32>
    %4 = vector.broadcast %3 : vector<1x40xf32> to vector<8x40xf32>
    %5 = arith.addf %2, %4 : vector<8x40xf32>
    %cst_5 = arith.constant 0.000000e+00 : f32
    %6 = vector.broadcast %cst_5 : f32 to vector<8x40xf32>
    %7 = arith.maximumf %5, %6 : vector<8x40xf32>
    %c0_6 = arith.constant 0 : index
    %c0_7 = arith.constant 0 : index
    %8 = vector.load %arg4[%c0_6, %c0_7] : memref<40x30xf32, #tpu.memory_space<vmem>>, vector<40x30xf32>
    %cst_8 = arith.constant dense<0.000000e+00> : vector<8x30xf32>
    %9 = tpu.matmul %7, %8, %cst_8 {dimension_numbers = #tpu.dot_dimension_numbers<[1], [0], [0], [1], [0, 0, 1, 1], [], []>} : vector<8x40xf32>, vector<40x30xf32>, vector<8x30xf32> -> vector<8x30xf32>
    %c0_9 = arith.constant 0 : index
    %c0_10 = arith.constant 0 : index
    %10 = vector.load %arg5[%c0_9, %c0_10] : memref<1x30xf32, #tpu.memory_space<vmem>>, vector<1x30xf32>
    %11 = vector.broadcast %10 : vector<1x30xf32> to vector<8x30xf32>
    %12 = arith.addf %9, %11 : vector<8x30xf32>
    %cst_11 = arith.constant 0.000000e+00 : f32
    %13 = vector.broadcast %cst_11 : f32 to vector<8x30xf32>
    %14 = arith.maximumf %12, %13 : vector<8x30xf32>
    %c0_12 = arith.constant 0 : index
    %c0_13 = arith.constant 0 : index
    %15 = vector.load %arg6[%c0_12, %c0_13] : memref<30x20xf32, #tpu.memory_space<vmem>>, vector<30x20xf32>
    %cst_14 = arith.constant dense<0.000000e+00> : vector<8x20xf32>
    %16 = tpu.matmul %14, %15, %cst_14 {dimension_numbers = #tpu.dot_dimension_numbers<[1], [0], [0], [1], [0, 0, 1, 1], [], []>} : vector<8x30xf32>, vector<30x20xf32>, vector<8x20xf32> -> vector<8x20xf32>
    %c0_15 = arith.constant 0 : index
    %c0_16 = arith.constant 0 : index
    %17 = vector.load %arg7[%c0_15, %c0_16] : memref<1x20xf32, #tpu.memory_space<vmem>>, vector<1x20xf32>
    %18 = vector.broadcast %17 : vector<1x20xf32> to vector<8x20xf32>
    %19 = arith.addf %16, %18 : vector<8x20xf32>
    %cst_17 = arith.constant 0.000000e+00 : f32
    %20 = vector.broadcast %cst_17 : f32 to vector<8x20xf32>
    %21 = arith.maximumf %19, %20 : vector<8x20xf32>
    %c0_18 = arith.constant 0 : index
    %c0_19 = arith.constant 0 : index
    %22 = vector.load %arg8[%c0_18, %c0_19] : memref<20x30xf32, #tpu.memory_space<vmem>>, vector<20x30xf32>
    %cst_20 = arith.constant dense<0.000000e+00> : vector<8x30xf32>
    %23 = tpu.matmul %21, %22, %cst_20 {dimension_numbers = #tpu.dot_dimension_numbers<[1], [0], [0], [1], [0, 0, 1, 1], [], []>} : vector<8x20xf32>, vector<20x30xf32>, vector<8x30xf32> -> vector<8x30xf32>
    %c0_21 = arith.constant 0 : index
    %c0_22 = arith.constant 0 : index
    %24 = vector.load %arg9[%c0_21, %c0_22] : memref<1x30xf32, #tpu.memory_space<vmem>>, vector<1x30xf32>
    %25 = vector.broadcast %24 : vector<1x30xf32> to vector<8x30xf32>
    %26 = arith.addf %23, %25 : vector<8x30xf32>
    %cst_23 = arith.constant 0.000000e+00 : f32
    %27 = vector.broadcast %cst_23 : f32 to vector<8x30xf32>
    %28 = arith.maximumf %26, %27 : vector<8x30xf32>
    %c0_24 = arith.constant 0 : index
    %c0_25 = arith.constant 0 : index
    %29 = vector.load %arg10[%c0_24, %c0_25] : memref<30x40xf32, #tpu.memory_space<vmem>>, vector<30x40xf32>
    %cst_26 = arith.constant dense<0.000000e+00> : vector<8x40xf32>
    %30 = tpu.matmul %28, %29, %cst_26 {dimension_numbers = #tpu.dot_dimension_numbers<[1], [0], [0], [1], [0, 0, 1, 1], [], []>} : vector<8x30xf32>, vector<30x40xf32>, vector<8x40xf32> -> vector<8x40xf32>
    %c0_27 = arith.constant 0 : index
    %c0_28 = arith.constant 0 : index
    %31 = vector.load %arg11[%c0_27, %c0_28] : memref<1x40xf32, #tpu.memory_space<vmem>>, vector<1x40xf32>
    %32 = vector.broadcast %31 : vector<1x40xf32> to vector<8x40xf32>
    %33 = arith.addf %30, %32 : vector<8x40xf32>
    %cst_29 = arith.constant 0.000000e+00 : f32
    %34 = vector.broadcast %cst_29 : f32 to vector<8x40xf32>
    %35 = arith.maximumf %33, %34 : vector<8x40xf32>
    %36 = tpu.concatenate %35, %0 in 1 : vector<8x40xf32>, vector<8x40xf32> -> vector<8x80xf32>
    %c0_30 = arith.constant 0 : index
    %c0_31 = arith.constant 0 : index
    %37 = vector.load %arg12[%c0_30, %c0_31] : memref<80x200xf32, #tpu.memory_space<vmem>>, vector<80x200xf32>
    %cst_32 = arith.constant dense<0.000000e+00> : vector<8x200xf32>
    %38 = tpu.matmul %36, %37, %cst_32 {dimension_numbers = #tpu.dot_dimension_numbers<[1], [0], [0], [1], [0, 0, 1, 1], [], []>} : vector<8x80xf32>, vector<80x200xf32>, vector<8x200xf32> -> vector<8x200xf32>
    %c0_33 = arith.constant 0 : index
    %c0_34 = arith.constant 0 : index
    %39 = vector.load %arg13[%c0_33, %c0_34] : memref<1x200xf32, #tpu.memory_space<vmem>>, vector<1x200xf32>
    %40 = vector.broadcast %39 : vector<1x200xf32> to vector<8x200xf32>
    %41 = arith.addf %38, %40 : vector<8x200xf32>
    %42 = arith.mulf %41, %41 : vector<8x200xf32>
    %c0_35 = arith.constant 0 : index
    %c0_36 = arith.constant 0 : index
    %43 = vector.load %arg14[%c0_35, %c0_36] : memref<200x5xf32, #tpu.memory_space<vmem>>, vector<200x5xf32>
    %cst_37 = arith.constant dense<0.000000e+00> : vector<8x5xf32>
    %44 = tpu.matmul %42, %43, %cst_37 {dimension_numbers = #tpu.dot_dimension_numbers<[1], [0], [0], [1], [0, 0, 1, 1], [], []>} : vector<8x200xf32>, vector<200x5xf32>, vector<8x5xf32> -> vector<8x5xf32>
    %c0_38 = arith.constant 0 : index
    %c0_39 = arith.constant 0 : index
    %c0_40 = arith.constant 0 : index
    %45 = vector.load %arg15[%c0_38, %c0_39, %c0_40] : memref<8x8x8xf32, #tpu.memory_space<vmem>>, vector<8x8x8xf32>
    %46 = vector.extract_strided_slice %45 {offsets = [0, 0, 0], sizes = [1, 5, 4], strides = [1, 1, 1]} : vector<8x8x8xf32> to vector<1x5x4xf32>
    %47 = vector.shape_cast %46 : vector<1x5x4xf32> to vector<5x4xf32>
    %48 = vector.extract_strided_slice %45 {offsets = [1, 0, 0], sizes = [1, 1, 4], strides = [1, 1, 1]} : vector<8x8x8xf32> to vector<1x1x4xf32>
    %49 = vector.shape_cast %48 : vector<1x1x4xf32> to vector<1x4xf32>
    %cst_41 = arith.constant dense<0.000000e+00> : vector<8x4xf32>
    %50 = tpu.matmul %44, %47, %cst_41 {dimension_numbers = #tpu.dot_dimension_numbers<[1], [0], [0], [1], [0, 0, 1, 1], [], []>} : vector<8x5xf32>, vector<5x4xf32>, vector<8x4xf32> -> vector<8x4xf32>
    %51 = vector.broadcast %49 : vector<1x4xf32> to vector<8x4xf32>
    %52 = arith.addf %50, %51 : vector<8x4xf32>
    %cst_42 = arith.constant 0.000000e+00 : f32
    %53 = vector.broadcast %cst_42 : f32 to vector<8x4xf32>
    %54 = arith.maximumf %52, %53 : vector<8x4xf32>
    %55 = vector.extract_strided_slice %45 {offsets = [2, 0, 0], sizes = [1, 4, 1], strides = [1, 1, 1]} : vector<8x8x8xf32> to vector<1x4x1xf32>
    %56 = vector.shape_cast %55 : vector<1x4x1xf32> to vector<4x1xf32>
    %57 = vector.extract_strided_slice %45 {offsets = [3, 0, 0], sizes = [1, 1, 1], strides = [1, 1, 1]} : vector<8x8x8xf32> to vector<1x1x1xf32>
    %58 = vector.shape_cast %57 : vector<1x1x1xf32> to vector<1x1xf32>
    %cst_43 = arith.constant dense<0.000000e+00> : vector<8x1xf32>
    %59 = tpu.matmul %54, %56, %cst_43 {dimension_numbers = #tpu.dot_dimension_numbers<[1], [0], [0], [1], [0, 0, 1, 1], [], []>} : vector<8x4xf32>, vector<4x1xf32>, vector<8x1xf32> -> vector<8x1xf32>
    %60 = vector.broadcast %58 : vector<1x1xf32> to vector<8x1xf32>
    %61 = arith.addf %59, %60 : vector<8x1xf32>
    %cst_44 = arith.constant 0.000000e+00 : f32
    %62 = vector.broadcast %cst_44 : f32 to vector<8x1xf32>
    %63 = arith.maximumf %61, %62 : vector<8x1xf32>
    %cst_45 = arith.constant 0.000000e+00 : f32
    %64 = vector.broadcast %cst_45 : f32 to vector<8x1xf32>
    %65 = arith.maximumf %63, %64 : vector<8x1xf32>
    %66 = vector.extract_strided_slice %45 {offsets = [4, 0, 0], sizes = [1, 1, 4], strides = [1, 1, 1]} : vector<8x8x8xf32> to vector<1x1x4xf32>
    %67 = vector.shape_cast %66 : vector<1x1x4xf32> to vector<1x4xf32>
    %68 = vector.extract_strided_slice %45 {offsets = [5, 0, 0], sizes = [1, 1, 4], strides = [1, 1, 1]} : vector<8x8x8xf32> to vector<1x1x4xf32>
    %69 = vector.shape_cast %68 : vector<1x1x4xf32> to vector<1x4xf32>
    %cst_46 = arith.constant dense<0.000000e+00> : vector<8x4xf32>
    %70 = tpu.matmul %65, %67, %cst_46 {dimension_numbers = #tpu.dot_dimension_numbers<[1], [0], [0], [1], [0, 0, 1, 1], [], []>} : vector<8x1xf32>, vector<1x4xf32>, vector<8x4xf32> -> vector<8x4xf32>
    %71 = vector.broadcast %69 : vector<1x4xf32> to vector<8x4xf32>
    %72 = arith.addf %70, %71 : vector<8x4xf32>
    %cst_47 = arith.constant 0.000000e+00 : f32
    %73 = vector.broadcast %cst_47 : f32 to vector<8x4xf32>
    %74 = arith.maximumf %72, %73 : vector<8x4xf32>
    %75 = vector.extract_strided_slice %45 {offsets = [6, 0, 0], sizes = [1, 4, 5], strides = [1, 1, 1]} : vector<8x8x8xf32> to vector<1x4x5xf32>
    %76 = vector.shape_cast %75 : vector<1x4x5xf32> to vector<4x5xf32>
    %77 = vector.extract_strided_slice %45 {offsets = [7, 0, 0], sizes = [1, 1, 5], strides = [1, 1, 1]} : vector<8x8x8xf32> to vector<1x1x5xf32>
    %78 = vector.shape_cast %77 : vector<1x1x5xf32> to vector<1x5xf32>
    %cst_48 = arith.constant dense<0.000000e+00> : vector<8x5xf32>
    %79 = tpu.matmul %74, %76, %cst_48 {dimension_numbers = #tpu.dot_dimension_numbers<[1], [0], [0], [1], [0, 0, 1, 1], [], []>} : vector<8x4xf32>, vector<4x5xf32>, vector<8x5xf32> -> vector<8x5xf32>
    %80 = vector.broadcast %78 : vector<1x5xf32> to vector<8x5xf32>
    %81 = arith.addf %79, %80 : vector<8x5xf32>
    %82 = tpu.concatenate %44, %63, %81 in 1 : vector<8x5xf32>, vector<8x1xf32>, vector<8x5xf32> -> vector<8x11xf32>
    %c0_49 = arith.constant 0 : index
    %c0_50 = arith.constant 0 : index
    %83 = vector.load %arg16[%c0_49, %c0_50] : memref<8x11xf32, #tpu.memory_space<vmem>>, vector<8x11xf32>
    tpu.vector_store %arg16[%c0_49, %c0_50], %82 {strides = array<i32>} : memref<8x11xf32, #tpu.memory_space<vmem>>, vector<8x11xf32>,
    return
  }
  func.func @transform_0(%arg0: i32) -> (i32, i32) {
    %c0_i32 = arith.constant 0 : i32
    %c0_i32_0 = arith.constant 0 : i32
    return %arg0, %c0_i32 : i32, i32
  }
  func.func @transform_1(%arg0: i32) -> (i32, i32) {
    %c0_i32 = arith.constant 0 : i32
    %c0_i32_0 = arith.constant 0 : i32
    %c0_i32_1 = arith.constant 0 : i32
    return %c0_i32, %c0_i32_0 : i32, i32
  }
  func.func @transform_2(%arg0: i32) -> (i32, i32) {
    %c0_i32 = arith.constant 0 : i32
    %c0_i32_0 = arith.constant 0 : i32
    %c0_i32_1 = arith.constant 0 : i32
    return %c0_i32, %c0_i32_0 : i32, i32
  }
  func.func @transform_3(%arg0: i32) -> (i32, i32) {
    %c0_i32 = arith.constant 0 : i32
    %c0_i32_0 = arith.constant 0 : i32
    %c0_i32_1 = arith.constant 0 : i32
    return %c0_i32, %c0_i32_0 : i32, i32
  }
  func.func @transform_4(%arg0: i32) -> (i32, i32) {
    %c0_i32 = arith.constant 0 : i32
    %c0_i32_0 = arith.constant 0 : i32
    %c0_i32_1 = arith.constant 0 : i32
    return %c0_i32, %c0_i32_0 : i32, i32
  }
  func.func @transform_5(%arg0: i32) -> (i32, i32) {
    %c0_i32 = arith.constant 0 : i32
    %c0_i32_0 = arith.constant 0 : i32
    %c0_i32_1 = arith.constant 0 : i32
    return %c0_i32, %c0_i32_0 : i32, i32
  }
  func.func @transform_6(%arg0: i32) -> (i32, i32) {
    %c0_i32 = arith.constant 0 : i32
    %c0_i32_0 = arith.constant 0 : i32
    %c0_i32_1 = arith.constant 0 : i32
    return %c0_i32, %c0_i32_0 : i32, i32
  }
  func.func @transform_7(%arg0: i32) -> (i32, i32) {
    %c0_i32 = arith.constant 0 : i32
    %c0_i32_0 = arith.constant 0 : i32
    %c0_i32_1 = arith.constant 0 : i32
    return %c0_i32, %c0_i32_0 : i32, i32
  }
  func.func @transform_8(%arg0: i32) -> (i32, i32) {
    %c0_i32 = arith.constant 0 : i32
    %c0_i32_0 = arith.constant 0 : i32
    %c0_i32_1 = arith.constant 0 : i32
    return %c0_i32, %c0_i32_0 : i32, i32
  }
  func.func @transform_9(%arg0: i32) -> (i32, i32) {
    %c0_i32 = arith.constant 0 : i32
    %c0_i32_0 = arith.constant 0 : i32
    %c0_i32_1 = arith.constant 0 : i32
    return %c0_i32, %c0_i32_0 : i32, i32
  }
  func.func @transform_10(%arg0: i32) -> (i32, i32) {
    %c0_i32 = arith.constant 0 : i32
    %c0_i32_0 = arith.constant 0 : i32
    %c0_i32_1 = arith.constant 0 : i32
    return %c0_i32, %c0_i32_0 : i32, i32
  }
  func.func @transform_11(%arg0: i32) -> (i32, i32) {
    %c0_i32 = arith.constant 0 : i32
    %c0_i32_0 = arith.constant 0 : i32
    %c0_i32_1 = arith.constant 0 : i32
    return %c0_i32, %c0_i32_0 : i32, i32
  }
  func.func @transform_12(%arg0: i32) -> (i32, i32) {
    %c0_i32 = arith.constant 0 : i32
    %c0_i32_0 = arith.constant 0 : i32
    %c0_i32_1 = arith.constant 0 : i32
    return %c0_i32, %c0_i32_0 : i32, i32
  }
  func.func @transform_13(%arg0: i32) -> (i32, i32) {
    %c0_i32 = arith.constant 0 : i32
    %c0_i32_0 = arith.constant 0 : i32
    %c0_i32_1 = arith.constant 0 : i32
    return %c0_i32, %c0_i32_0 : i32, i32
  }
  func.func @transform_14(%arg0: i32) -> (i32, i32, i32) {
    %c0_i32 = arith.constant 0 : i32
    %c0_i32_0 = arith.constant 0 : i32
    %c0_i32_1 = arith.constant 0 : i32
    %c0_i32_2 = arith.constant 0 : i32
    return %c0_i32, %c0_i32_0, %c0_i32_1 : i32, i32, i32
  }
  func.func @transform_15(%arg0: i32) -> (i32, i32) {
    %c0_i32 = arith.constant 0 : i32
    %c0_i32_0 = arith.constant 0 : i32
    return %arg0, %c0_i32 : i32, i32
  }
}

</mosaic_0001>

<llo_original>
// kernel: tpu_custom_call.1
$region0: #{tpu_custom_call.1}
  #allocation0 [shape = 'u32[]', space=smem, size = 0x4, offset = 0x4, fixed_abs, tag = 'smem constant byte address 0x4 - core index']
  #allocation1 [shape = 'u32[72,128]{1,0:T(1,128)}', space=vmem, size = 0x9000, scoped, tag = 'internal scratch']
  %s0 = inlined_call_operand.hbm [shape: f32[8,40], index: 0, kind: input, shape index: {}]
  %s1 = inlined_call_operand.vmem [shape: f32[40,40], index: 1, kind: input, shape index: {}]
  %s2 = inlined_call_operand.hbm [shape: f32[1,40], index: 2, kind: input, shape index: {}]
  %s3 = inlined_call_operand.vmem [shape: f32[40,30], index: 3, kind: input, shape index: {}]
  %s4 = inlined_call_operand.vmem [shape: f32[1,30], index: 4, kind: input, shape index: {}]
  %s5 = inlined_call_operand.vmem [shape: f32[30,20], index: 5, kind: input, shape index: {}]
  %s6 = inlined_call_operand.hbm [shape: f32[1,20], index: 6, kind: input, shape index: {}]
  %s7 = inlined_call_operand.hbm [shape: f32[20,30], index: 7, kind: input, shape index: {}]
  %s8 = inlined_call_operand.vmem [shape: f32[1,30], index: 8, kind: input, shape index: {}]
  %s9 = inlined_call_operand.vmem [shape: f32[30,40], index: 9, kind: input, shape index: {}]
  %s10 = inlined_call_operand.vmem [shape: f32[1,40], index: 10, kind: input, shape index: {}]
  %s11 = inlined_call_operand.vmem [shape: f32[80,200], index: 11, kind: input, shape index: {}]
  %s12 = inlined_call_operand.vmem [shape: f32[1,200], index: 12, kind: input, shape index: {}]
  %s13 = inlined_call_operand.vmem [shape: f32[200,5], index: 13, kind: input, shape index: {}]
  %s14 = inlined_call_operand.vmem [shape: f32[8,8,8], index: 14, kind: input, shape index: {}]
  %s15 = inlined_call_operand.hbm [shape: f32[8,11], index: 15, kind: output, shape index: {}]
  %s16 = sld [smem:[#allocation0]]
  $region86: #{tpu_custom_call.1} parent=0
    _
  %s18 = ssub.s32 1, %s16
  %s19 = scalar_select 0, %s18, %s16
  $region1: #{tpu_custom_call.1} parent=0
    #allocation2 [shape = 'u8[4096]{0}', space=vmem, size = 0x1000, scoped, tag = 'input window, operand 0, single buffered']
    #allocation3 [shape = 's32[1]{0}', space=sflag, size = 0x4, scoped, tag = 'scoped memory for tpu_custom_call.1']
    #allocation4 [shape = 's32[1]{0}', space=sflag, size = 0x4, scoped, tag = 'scoped memory for tpu_custom_call.1']
    #allocation5 [shape = 'u8[512]{0}', space=vmem, size = 0x400, scoped, tag = 'input window, operand 2, single buffered']
    #allocation6 [shape = 's32[1]{0}', space=sflag, size = 0x4, scoped, tag = 'scoped memory for tpu_custom_call.1']
    #allocation7 [shape = 'u8[512]{0}', space=vmem, size = 0x400, scoped, tag = 'input window, operand 6, single buffered']
    #allocation8 [shape = 'u8[12288]{0}', space=vmem, size = 0x3000, scoped, tag = 'input window, operand 7, single buffered']
    #allocation9 [shape = 's32[1]{0}', space=sflag, size = 0x4, scoped, tag = 'scoped memory for tpu_custom_call.1']
    #allocation10 [shape = 'u8[4096]{0}', space=vmem, size = 0x1000, scoped, tag = 'output window, operand 0, single buffered']
    %20 = vsyncpa [#allocation3], 0
    %21 = vsyncpa [#allocation6], 0
    %22 = vsyncpa [#allocation9], 0
    %23 = vsyncpa [#allocation4], 0
    // Predicated region
    $region2: #{tpu_custom_call.1} parent=1 // pred_check
      _
    $region3: #{tpu_custom_call.1} parent=1 // pred_check_branch
      %25 = sbr.rel (0) target = $region5
    $region4: #{tpu_custom_call.1} parent=1 // pred_region
      %27 = vsyncadd [#allocation3], 0
      %s29 = sshll.u32 %s0, 4
      %s30 = int_to_ptr.hbm [resolvable:$true] %s29
      %s31 = sshll.u32 [#allocation2], 4
      %s32 = int_to_ptr.vmem [resolvable:$true] %s31
      %34 = dma.hbm_to_vmem [thread:$0]  %s30, 128, %s32, [#allocation3]
    $region5: #{tpu_custom_call.1} parent=1 // pred_fallthru
      _
    // Predicated region
    $region6: #{tpu_custom_call.1} parent=1 // pred_check
      _
    $region7: #{tpu_custom_call.1} parent=1 // pred_check_branch
      %36 = sbr.rel (0) target = $region9
    $region8: #{tpu_custom_call.1} parent=1 // pred_region
      _
    $region9: #{tpu_custom_call.1} parent=1 // pred_fallthru
      _
    // Predicated region
    $region10: #{tpu_custom_call.1} parent=1 // pred_check
      _
    $region11: #{tpu_custom_call.1} parent=1 // pred_check_branch
      %38 = sbr.rel (0) target = $region13
    $region12: #{tpu_custom_call.1} parent=1 // pred_region
      %40 = vsyncadd [#allocation6], 0
      %s42 = sshll.u32 %s2, 4
      %s43 = int_to_ptr.hbm [resolvable:$true] %s42
      %s44 = sshll.u32 [#allocation5], 4
      %s45 = int_to_ptr.vmem [resolvable:$true] %s44
      %47 = dma.hbm_to_vmem [thread:$0]  %s43, 16, %s45, [#allocation6]
    $region13: #{tpu_custom_call.1} parent=1 // pred_fallthru
      _
    // Predicated region
    $region14: #{tpu_custom_call.1} parent=1 // pred_check
      _
    $region15: #{tpu_custom_call.1} parent=1 // pred_check_branch
      %49 = sbr.rel (0) target = $region17
    $region16: #{tpu_custom_call.1} parent=1 // pred_region
      _
    $region17: #{tpu_custom_call.1} parent=1 // pred_fallthru
      _
    // Predicated region
    $region18: #{tpu_custom_call.1} parent=1 // pred_check
      _
    $region19: #{tpu_custom_call.1} parent=1 // pred_check_branch
      %51 = sbr.rel (0) target = $region21
    $region20: #{tpu_custom_call.1} parent=1 // pred_region
      _
    $region21: #{tpu_custom_call.1} parent=1 // pred_fallthru
      _
    // Predicated region
    $region22: #{tpu_custom_call.1} parent=1 // pred_check
      _
    $region23: #{tpu_custom_call.1} parent=1 // pred_check_branch
      %53 = sbr.rel (0) target = $region25
    $region24: #{tpu_custom_call.1} parent=1 // pred_region
      _
    $region25: #{tpu_custom_call.1} parent=1 // pred_fallthru
      _
    // Predicated region
    $region26: #{tpu_custom_call.1} parent=1 // pred_check
      _
    $region27: #{tpu_custom_call.1} parent=1 // pred_check_branch
      %55 = sbr.rel (0) target = $region29
    $region28: #{tpu_custom_call.1} parent=1 // pred_region
      %57 = vsyncadd [#allocation6], 0
      %s59 = sshll.u32 %s6, 4
      %s60 = int_to_ptr.hbm [resolvable:$true] %s59
      %s61 = sshll.u32 [#allocation7], 4
      %s62 = int_to_ptr.vmem [resolvable:$true] %s61
      %64 = dma.hbm_to_vmem [thread:$0]  %s60, 16, %s62, [#allocation6]
    $region29: #{tpu_custom_call.1} parent=1 // pred_fallthru
      _
    // Predicated region
    $region30: #{tpu_custom_call.1} parent=1 // pred_check
      _
    $region31: #{tpu_custom_call.1} parent=1 // pred_check_branch
      %66 = sbr.rel (0) target = $region33
    $region32: #{tpu_custom_call.1} parent=1 // pred_region
      %68 = vsyncadd [#allocation9], 0
      %s69 = sshll.u32 %s7, 4
      %s70 = int_to_ptr.hbm [resolvable:$true] %s69
      %s71 = sshll.u32 [#allocation8], 4
      %s72 = int_to_ptr.vmem [resolvable:$true] %s71
      %77 = dma.hbm_to_vmem [thread:$0]  %s70, 384, %s72, [#allocation9], 128, 128, 8
    $region33: #{tpu_custom_call.1} parent=1 // pred_fallthru
      _
    // Predicated region
    $region34: #{tpu_custom_call.1} parent=1 // pred_check
      _
    $region35: #{tpu_custom_call.1} parent=1 // pred_check_branch
      %79 = sbr.rel (0) target = $region37
    $region36: #{tpu_custom_call.1} parent=1 // pred_region
      _
    $region37: #{tpu_custom_call.1} parent=1 // pred_fallthru
      _
    // Predicated region
    $region38: #{tpu_custom_call.1} parent=1 // pred_check
      _
    $region39: #{tpu_custom_call.1} parent=1 // pred_check_branch
      %81 = sbr.rel (0) target = $region41
    $region40: #{tpu_custom_call.1} parent=1 // pred_region
      _
    $region41: #{tpu_custom_call.1} parent=1 // pred_fallthru
      _
    // Predicated region
    $region42: #{tpu_custom_call.1} parent=1 // pred_check
      _
    $region43: #{tpu_custom_call.1} parent=1 // pred_check_branch
      %83 = sbr.rel (0) target = $region45
    $region44: #{tpu_custom_call.1} parent=1 // pred_region
      _
    $region45: #{tpu_custom_call.1} parent=1 // pred_fallthru
      _
    // Predicated region
    $region46: #{tpu_custom_call.1} parent=1 // pred_check
      _
    $region47: #{tpu_custom_call.1} parent=1 // pred_check_branch
      %85 = sbr.rel (0) target = $region49
    $region48: #{tpu_custom_call.1} parent=1 // pred_region
      _
    $region49: #{tpu_custom_call.1} parent=1 // pred_fallthru
      _
    // Predicated region
    $region50: #{tpu_custom_call.1} parent=1 // pred_check
      _
    $region51: #{tpu_custom_call.1} parent=1 // pred_check_branch
      %87 = sbr.rel (0) target = $region53
    $region52: #{tpu_custom_call.1} parent=1 // pred_region
      _
    $region53: #{tpu_custom_call.1} parent=1 // pred_fallthru
      _
    // Predicated region
    $region54: #{tpu_custom_call.1} parent=1 // pred_check
      _
    $region55: #{tpu_custom_call.1} parent=1 // pred_check_branch
      %89 = sbr.rel (0) target = $region57
    $region56: #{tpu_custom_call.1} parent=1 // pred_region
      _
    $region57: #{tpu_custom_call.1} parent=1 // pred_fallthru
      _
    // Predicated region
    $region58: #{tpu_custom_call.1} parent=1 // pred_check
      _
    $region59: #{tpu_custom_call.1} parent=1 // pred_check_branch
      %91 = sbr.rel (0) target = $region61
    $region60: #{tpu_custom_call.1} parent=1 // pred_region
      _
    $region61: #{tpu_custom_call.1} parent=1 // pred_fallthru
      _
    // Predicated region
    $region62: #{tpu_custom_call.1} parent=1 // pred_check
      _
    $region63: #{tpu_custom_call.1} parent=1 // pred_check_branch
      %93 = sbr.rel (0) target = $region65
    $region64: #{tpu_custom_call.1} parent=1 // pred_region
      %95 = dma.done [#allocation3], 128
    $region65: #{tpu_custom_call.1} parent=1 // pred_fallthru
      _
    // Predicated region
    $region66: #{tpu_custom_call.1} parent=1 // pred_check
      _
    $region67: #{tpu_custom_call.1} parent=1 // pred_check_branch
      %97 = sbr.rel (0) target = $region69
    $region68: #{tpu_custom_call.1} parent=1 // pred_region
      %99 = dma.done [#allocation6], 16
    $region69: #{tpu_custom_call.1} parent=1 // pred_fallthru
      _
    // Predicated region
    $region70: #{tpu_custom_call.1} parent=1 // pred_check
      _
    $region71: #{tpu_custom_call.1} parent=1 // pred_check_branch
      %101 = sbr.rel (0) target = $region73
    $region72: #{tpu_custom_call.1} parent=1 // pred_region
      %103 = dma.done [#allocation6], 16
    $region73: #{tpu_custom_call.1} parent=1 // pred_fallthru
      _
    // Predicated region
    $region74: #{tpu_custom_call.1} parent=1 // pred_check
      _
    $region75: #{tpu_custom_call.1} parent=1 // pred_check_branch
      %105 = sbr.rel (0) target = $region77
    $region76: #{tpu_custom_call.1} parent=1 // pred_region
      %107 = dma.done [#allocation9], 384
    $region77: #{tpu_custom_call.1} parent=1 // pred_fallthru
      _
    %v108 = vld [vmem:[#allocation2] sm:$0xff]
    %v109 = vld [vmem:[%s1] sm:$0xff]
    %v110 = vld [vmem:[%s1 + $0x8] sm:$0xff]
    %v111 = vld [vmem:[%s1 + $0x10] sm:$0xff]
    %v112 = vld [vmem:[%s1 + $0x18] sm:$0xff]
    %v113 = vld [vmem:[%s1 + $0x20] sm:$0xff]
    %v114 = vld [vmem:[#allocation5] sm:$0x1]
    %v116 = vperm.slane %v114, 0
    %vm118 = vcmask 326656
    %v120 = vsel %vm118, %v108, 0
    %122 = vmatpush.msra.mxu0 0.0
    %123 = vmatpush.msra.mxu0 0.0
    %124 = vmatpush.msra.mxu0 0.0
    %125 = vmatpush.msra.mxu0 0.0
    %126 = vmatpush.msra.mxu0 0.0
    %127 = vmatpush.msra.mxu0 0.0
    %128 = vmatpush.msra.mxu0 0.0
    %129 = vmatpush.msra.mxu0 0.0
    %130 = vmatpush.msra.mxu0 0.0
    %131 = vmatpush.msra.mxu0 0.0
    %132 = vmatpush.msra.mxu0 0.0
    %133 = vmatpush.msra.mxu0 %v113
    %134 = vmatpush.msra.mxu0 %v112
    %135 = vmatpush.msra.mxu0 %v111
    %136 = vmatpush.msra.mxu0 %v110
    %137 = vmatpush.msra.mxu0 %v109
    %138 = vmatmul.f32.gmra.mxu0 %v120
    %v139 = vpop.f32.mrf.mxu0
    %v140 = vadd.f32 %v116, %v139
    %141 = vdwg.mxu0
    %v142 = vmax.f32 %v140, 0.0
    %v143 = vld [vmem:[%s3] sm:$0xff]
    %v144 = vld [vmem:[%s3 + $0x8] sm:$0xff]
    %v145 = vld [vmem:[%s3 + $0x10] sm:$0xff]
    %v146 = vld [vmem:[%s3 + $0x18] sm:$0xff]
    %v147 = vld [vmem:[%s3 + $0x20] sm:$0xff]
    %v148 = vld [vmem:[%s4] sm:$0x1]
    %v150 = vperm.slane %v148, 0
    %v153 = vsel %vm118, %v142, 0
    %155 = vmatpush.msra.mxu0 0.0
    %156 = vmatpush.msra.mxu0 0.0
    %157 = vmatpush.msra.mxu0 0.0
    %158 = vmatpush.msra.mxu0 0.0
    %159 = vmatpush.msra.mxu0 0.0
    %160 = vmatpush.msra.mxu0 0.0
    %161 = vmatpush.msra.mxu0 0.0
    %162 = vmatpush.msra.mxu0 0.0
    %163 = vmatpush.msra.mxu0 0.0
    %164 = vmatpush.msra.mxu0 0.0
    %165 = vmatpush.msra.mxu0 0.0
    %166 = vmatpush.msra.mxu0 %v147
    %167 = vmatpush.msra.mxu0 %v146
    %168 = vmatpush.msra.mxu0 %v145
    %169 = vmatpush.msra.mxu0 %v144
    %170 = vmatpush.msra.mxu0 %v143
    %171 = vmatmul.f32.gmra.mxu0 %v153
    %v172 = vpop.f32.mrf.mxu0
    %v173 = vadd.f32 %v150, %v172
    %174 = vdwg.mxu0
    %v175 = vmax.f32 %v173, 0.0
    %v176 = vld [vmem:[%s5] sm:$0xff]
    %v177 = vld [vmem:[%s5 + $0x8] sm:$0xff]
    %v178 = vld [vmem:[%s5 + $0x10] sm:$0xff]
    %v179 = vld [vmem:[%s5 + $0x18] sm:$0x3f]
    %v180 = vld [vmem:[#allocation7] sm:$0x1]
    %v182 = vperm.slane %v180, 0
    %vm184 = vcmask 244736
    %v186 = vsel %vm184, %v175, 0
    %vm188 = vcmask 1045504
    %v190 = vsel %vm188, %v179, 0
    %192 = vmatpush.msra.mxu0 0.0
    %193 = vmatpush.msra.mxu0 0.0
    %194 = vmatpush.msra.mxu0 0.0
    %195 = vmatpush.msra.mxu0 0.0
    %196 = vmatpush.msra.mxu0 0.0
    %197 = vmatpush.msra.mxu0 0.0
    %198 = vmatpush.msra.mxu0 0.0
    %199 = vmatpush.msra.mxu0 0.0
    %200 = vmatpush.msra.mxu0 0.0
    %201 = vmatpush.msra.mxu0 0.0
    %202 = vmatpush.msra.mxu0 0.0
    %203 = vmatpush.msra.mxu0 0.0
    %204 = vmatpush.msra.mxu0 %v190
    %205 = vmatpush.msra.mxu0 %v178
    %206 = vmatpush.msra.mxu0 %v177
    %207 = vmatpush.msra.mxu0 %v176
    %208 = vmatmul.f32.gmra.mxu0 %v186
    %v209 = vpop.f32.mrf.mxu0
    %v210 = vadd.f32 %v182, %v209
    %211 = vdwg.mxu0
    %v212 = vmax.f32 %v210, 0.0
    %v213 = vld [vmem:[#allocation8] sm:$0xff]
    %v214 = vld [vmem:[#allocation8 + $0x8] sm:$0xff]
    %v215 = vld [vmem:[#allocation8 + $0x10] sm:$0xf]
    %v216 = vld [vmem:[%s8] sm:$0x1]
    %v218 = vperm.slane %v216, 0
    %vm220 = vcmask 162816
    %v222 = vsel %vm220, %v212, 0
    %vm224 = vcmask 1043456
    %v226 = vsel %vm224, %v215, 0
    %228 = vmatpush.msra.mxu0 0.0
    %229 = vmatpush.msra.mxu0 0.0
    %230 = vmatpush.msra.mxu0 0.0
    %231 = vmatpush.msra.mxu0 0.0
    %232 = vmatpush.msra.mxu0 0.0
    %233 = vmatpush.msra.mxu0 0.0
    %234 = vmatpush.msra.mxu0 0.0
    %235 = vmatpush.msra.mxu0 0.0
    %236 = vmatpush.msra.mxu0 0.0
    %237 = vmatpush.msra.mxu0 0.0
    %238 = vmatpush.msra.mxu0 0.0
    %239 = vmatpush.msra.mxu0 0.0
    %240 = vmatpush.msra.mxu0 0.0
    %241 = vmatpush.msra.mxu0 %v226
    %242 = vmatpush.msra.mxu0 %v214
    %243 = vmatpush.msra.mxu0 %v213
    %244 = vmatmul.f32.gmra.mxu0 %v222
    %v245 = vpop.f32.mrf.mxu0
    %v246 = vadd.f32 %v218, %v245
    %247 = vdwg.mxu0
    %v248 = vmax.f32 %v246, 0.0
    %v249 = vld [vmem:[%s9] sm:$0xff]
    %v250 = vld [vmem:[%s9 + $0x8] sm:$0xff]
    %v251 = vld [vmem:[%s9 + $0x10] sm:$0xff]
    %v252 = vld [vmem:[%s9 + $0x18] sm:$0x3f]
    %v253 = vld [vmem:[%s10] sm:$0x1]
    %v255 = vperm.slane %v253, 0
    %v258 = vsel %vm184, %v248, 0
    %v261 = vsel %vm188, %v252, 0
    %263 = vmatpush.msra.mxu0 0.0
    %264 = vmatpush.msra.mxu0 0.0
    %265 = vmatpush.msra.mxu0 0.0
    %266 = vmatpush.msra.mxu0 0.0
    %267 = vmatpush.msra.mxu0 0.0
    %268 = vmatpush.msra.mxu0 0.0
    %269 = vmatpush.msra.mxu0 0.0
    %270 = vmatpush.msra.mxu0 0.0
    %271 = vmatpush.msra.mxu0 0.0
    %272 = vmatpush.msra.mxu0 0.0
    %273 = vmatpush.msra.mxu0 0.0
    %274 = vmatpush.msra.mxu0 0.0
    %275 = vmatpush.msra.mxu0 %v261
    %276 = vmatpush.msra.mxu0 %v251
    %277 = vmatpush.msra.mxu0 %v250
    %278 = vmatpush.msra.mxu0 %v249
    %279 = vmatmul.f32.gmra.mxu0 %v258
    %v280 = vpop.f32.mrf.mxu0
    %v281 = vadd.f32 %v255, %v280
    %282 = vdwg.mxu0
    %v283 = vmax.f32 %v281, 0.0
    %284 = vrot.lane.b32.xlu0 %v108, 40
    %v285 = vpop.permute.xlu0 %284
    %v287 = vsel %vm118, %v283, %v285
    %v288 = vld [vmem:[%s11] sm:$0xff]
    %v289 = vld [vmem:[%s11 + $0x8] sm:$0xff]
    %v290 = vld [vmem:[%s11 + $0x10] sm:$0xff]
    %v291 = vld [vmem:[%s11 + $0x18] sm:$0xff]
    %v292 = vld [vmem:[%s11 + $0x20] sm:$0xff]
    %v293 = vld [vmem:[%s11 + $0x28] sm:$0xff]
    %v294 = vld [vmem:[%s11 + $0x30] sm:$0xff]
    %v295 = vld [vmem:[%s11 + $0x38] sm:$0xff]
    %v296 = vld [vmem:[%s11 + $0x40] sm:$0xff]
    %v297 = vld [vmem:[%s11 + $0x48] sm:$0xff]
    %v298 = vld [vmem:[%s11 + $0x50] sm:$0xff]
    %v299 = vld [vmem:[%s11 + $0x58] sm:$0xff]
    %v300 = vld [vmem:[%s11 + $0x60] sm:$0xff]
    %v301 = vld [vmem:[%s11 + $0x68] sm:$0xff]
    %v302 = vld [vmem:[%s11 + $0x70] sm:$0xff]
    %v303 = vld [vmem:[%s11 + $0x78] sm:$0xff]
    %v304 = vld [vmem:[%s11 + $0x80] sm:$0xff]
    %v305 = vld [vmem:[%s11 + $0x88] sm:$0xff]
    %v306 = vld [vmem:[%s11 + $0x90] sm:$0xff]
    %v307 = vld [vmem:[%s11 + $0x98] sm:$0xff]
    %v308 = vld [vmem:[%s12] sm:$0x3]
    %v310 = vperm.slane %v308, 0
    %v311 = vperm.slane %v308, 1
    %vm314 = vcmask 654336
    %v316 = vsel %vm314, %v287, 0
    %318 = vmatpush.msra.mxu0 0.0
    %319 = vmatpush.msra.mxu0 0.0
    %320 = vmatpush.msra.mxu0 0.0
    %321 = vmatpush.msra.mxu0 0.0
    %322 = vmatpush.msra.mxu0 0.0
    %323 = vmatpush.msra.mxu0 0.0
    %324 = vmatpush.msra.mxu0 %v306
    %325 = vmatpush.msra.mxu0 %v304
    %326 = vmatpush.msra.mxu0 %v302
    %327 = vmatpush.msra.mxu0 %v300
    %328 = vmatpush.msra.mxu0 %v298
    %329 = vmatpush.msra.mxu0 %v296
    %330 = vmatpush.msra.mxu0 %v294
    %331 = vmatpush.msra.mxu0 %v292
    %332 = vmatpush.msra.mxu0 %v290
    %333 = vmatpush.msra.mxu0 %v288
    %334 = vmatmul.f32.gmra.mxu0 %v316
    %v335 = vpop.f32.mrf.mxu0
    %v336 = vadd.f32 %v310, %v335
    %337 = vdwg.mxu0
    %338 = vmatpush.msra.mxu0 0.0
    %339 = vmatpush.msra.mxu0 0.0
    %340 = vmatpush.msra.mxu0 0.0
    %341 = vmatpush.msra.mxu0 0.0
    %342 = vmatpush.msra.mxu0 0.0
    %343 = vmatpush.msra.mxu0 0.0
    %344 = vmatpush.msra.mxu0 %v307
    %345 = vmatpush.msra.mxu0 %v305
    %346 = vmatpush.msra.mxu0 %v303
    %347 = vmatpush.msra.mxu0 %v301
    %348 = vmatpush.msra.mxu0 %v299
    %349 = vmatpush.msra.mxu0 %v297
    %350 = vmatpush.msra.mxu0 %v295
    %351 = vmatpush.msra.mxu0 %v293
    %352 = vmatpush.msra.mxu0 %v291
    %353 = vmatpush.msra.mxu0 %v289
    %354 = vmatmul.f32.gmra.mxu0 %v316
    %v355 = vpop.f32.mrf.mxu0
    %v356 = vadd.f32 %v311, %v355
    %357 = vdwg.mxu0
    %v358 = vmul.f32 %v336, %v336
    %v359 = vmul.f32 %v356, %v356
    %v360 = vld [vmem:[%s13] sm:$0xff]
    %v361 = vld [vmem:[%s13 + $0x8] sm:$0xff]
    %v362 = vld [vmem:[%s13 + $0x10] sm:$0xff]
    %v363 = vld [vmem:[%s13 + $0x18] sm:$0xff]
    %v364 = vld [vmem:[%s13 + $0x20] sm:$0xff]
    %v365 = vld [vmem:[%s13 + $0x28] sm:$0xff]
    %v366 = vld [vmem:[%s13 + $0x30] sm:$0xff]
    %v367 = vld [vmem:[%s13 + $0x38] sm:$0xff]
    %v368 = vld [vmem:[%s13 + $0x40] sm:$0xff]
    %v369 = vld [vmem:[%s13 + $0x48] sm:$0xff]
    %v370 = vld [vmem:[%s13 + $0x50] sm:$0xff]
    %v371 = vld [vmem:[%s13 + $0x58] sm:$0xff]
    %v372 = vld [vmem:[%s13 + $0x60] sm:$0xff]
    %v373 = vld [vmem:[%s13 + $0x68] sm:$0xff]
    %v374 = vld [vmem:[%s13 + $0x70] sm:$0xff]
    %v375 = vld [vmem:[%s13 + $0x78] sm:$0xff]
    %v376 = vld [vmem:[%s13 + $0x80] sm:$0xff]
    %v377 = vld [vmem:[%s13 + $0x88] sm:$0xff]
    %v378 = vld [vmem:[%s13 + $0x90] sm:$0xff]
    %v379 = vld [vmem:[%s13 + $0x98] sm:$0xff]
    %v380 = vld [vmem:[%s13 + $0xa0] sm:$0xff]
    %v381 = vld [vmem:[%s13 + $0xa8] sm:$0xff]
    %v382 = vld [vmem:[%s13 + $0xb0] sm:$0xff]
    %v383 = vld [vmem:[%s13 + $0xb8] sm:$0xff]
    %v384 = vld [vmem:[%s13 + $0xc0] sm:$0xff]
    %vm385 = vcmask 588800
    %v387 = vsel %vm385, %v359, 0
    %389 = vmatpush.msra.mxu0 %v375
    %390 = vmatpush.msra.mxu0 %v374
    %391 = vmatpush.msra.mxu0 %v373
    %392 = vmatpush.msra.mxu0 %v372
    %393 = vmatpush.msra.mxu0 %v371
    %394 = vmatpush.msra.mxu0 %v370
    %395 = vmatpush.msra.mxu0 %v369
    %396 = vmatpush.msra.mxu0 %v368
    %397 = vmatpush.msra.mxu0 %v367
    %398 = vmatpush.msra.mxu0 %v366
    %399 = vmatpush.msra.mxu0 %v365
    %400 = vmatpush.msra.mxu0 %v364
    %401 = vmatpush.msra.mxu0 %v363
    %402 = vmatpush.msra.mxu0 %v362
    %403 = vmatpush.msra.mxu0 %v361
    %404 = vmatpush.msra.mxu0 %v360
    %405 = vmatmul.f32.gmra.mxu0 %v358
    %v406 = vpop.f32.mrf.mxu0
    %v407 = vadd.f32 0.0, %v406
    %408 = vdwg.mxu0
    %409 = vmatpush.msra.mxu0 0.0
    %410 = vmatpush.msra.mxu0 0.0
    %411 = vmatpush.msra.mxu0 0.0
    %412 = vmatpush.msra.mxu0 0.0
    %413 = vmatpush.msra.mxu0 0.0
    %414 = vmatpush.msra.mxu0 0.0
    %415 = vmatpush.msra.mxu0 0.0
    %416 = vmatpush.msra.mxu0 %v384
    %417 = vmatpush.msra.mxu0 %v383
    %418 = vmatpush.msra.mxu0 %v382
    %419 = vmatpush.msra.mxu0 %v381
    %420 = vmatpush.msra.mxu0 %v380
    %421 = vmatpush.msra.mxu0 %v379
    %422 = vmatpush.msra.mxu0 %v378
    %423 = vmatpush.msra.mxu0 %v377
    %424 = vmatpush.msra.mxu0 %v376
    %425 = vmatmul.f32.gmra.mxu0 %v387
    %v426 = vpop.f32.mrf.mxu0
    %v427 = vadd.f32 %v407, %v426
    %428 = vdwg.mxu0
    %v429 = vld [vmem:[%s14] sm:$0xff]
    %v430 = vld [vmem:[%s14 + $0x8] sm:$0xff]
    %v431 = vld [vmem:[%s14 + $0x10] sm:$0xff]
    %v432 = vld [vmem:[%s14 + $0x18] sm:$0xff]
    %v433 = vld [vmem:[%s14 + $0x20] sm:$0xff]
    %v434 = vld [vmem:[%s14 + $0x28] sm:$0xff]
    %v435 = vld [vmem:[%s14 + $0x30] sm:$0xff]
    %v436 = vld [vmem:[%s14 + $0x38] sm:$0xff]
    %v437 = vperm.slane %v430, 0
    %vm438 = vcmask 39936
    %v440 = vsel %vm438, %v427, 0
    %vm442 = vcmask 1044480
    %v444 = vsel %vm442, %v429, 0
    %446 = vmatpush.msra.mxu0 0.0
    %447 = vmatpush.msra.mxu0 0.0
    %448 = vmatpush.msra.mxu0 0.0
    %449 = vmatpush.msra.mxu0 0.0
    %450 = vmatpush.msra.mxu0 0.0
    %451 = vmatpush.msra.mxu0 0.0
    %452 = vmatpush.msra.mxu0 0.0
    %453 = vmatpush.msra.mxu0 0.0
    %454 = vmatpush.msra.mxu0 0.0
    %455 = vmatpush.msra.mxu0 0.0
    %456 = vmatpush.msra.mxu0 0.0
    %457 = vmatpush.msra.mxu0 0.0
    %458 = vmatpush.msra.mxu0 0.0
    %459 = vmatpush.msra.mxu0 0.0
    %460 = vmatpush.msra.mxu0 0.0
    %461 = vmatpush.msra.mxu0 %v444
    %462 = vmatmul.f32.gmra.mxu0 %v440
    %v463 = vpop.f32.mrf.mxu0
    %v464 = vadd.f32 %v437, %v463
    %465 = vdwg.mxu0
    %v466 = vmax.f32 %v464, 0.0
    %v467 = vperm.slane %v432, 0
    %vm468 = vcmask 31744
    %v470 = vsel %vm468, %v466, 0
    %v473 = vsel %vm224, %v431, 0
    %475 = vmatpush.msra.mxu0 0.0
    %476 = vmatpush.msra.mxu0 0.0
    %477 = vmatpush.msra.mxu0 0.0
    %478 = vmatpush.msra.mxu0 0.0
    %479 = vmatpush.msra.mxu0 0.0
    %480 = vmatpush.msra.mxu0 0.0
    %481 = vmatpush.msra.mxu0 0.0
    %482 = vmatpush.msra.mxu0 0.0
    %483 = vmatpush.msra.mxu0 0.0
    %484 = vmatpush.msra.mxu0 0.0
    %485 = vmatpush.msra.mxu0 0.0
    %486 = vmatpush.msra.mxu0 0.0
    %487 = vmatpush.msra.mxu0 0.0
    %488 = vmatpush.msra.mxu0 0.0
    %489 = vmatpush.msra.mxu0 0.0
    %490 = vmatpush.msra.mxu0 %v473
    %491 = vmatmul.f32.gmra.mxu0 %v470
    %v492 = vpop.f32.mrf.mxu0
    %v493 = vadd.f32 %v467, %v492
    %494 = vdwg.mxu0
    %v495 = vmax.f32 %v493, 0.0
    %v496 = vmax.f32 %v495, 0.0
    %v497 = vperm.slane %v434, 0
    %vm498 = vcmask 7168
    %v500 = vsel %vm498, %v496, 0
    %vm502 = vcmask 1040384
    %v504 = vsel %vm502, %v433, 0
    %506 = vmatpush.msra.mxu0 0.0
    %507 = vmatpush.msra.mxu0 0.0
    %508 = vmatpush.msra.mxu0 0.0
    %509 = vmatpush.msra.mxu0 0.0
    %510 = vmatpush.msra.mxu0 0.0
    %511 = vmatpush.msra.mxu0 0.0
    %512 = vmatpush.msra.mxu0 0.0
    %513 = vmatpush.msra.mxu0 0.0
    %514 = vmatpush.msra.mxu0 0.0
    %515 = vmatpush.msra.mxu0 0.0
    %516 = vmatpush.msra.mxu0 0.0
    %517 = vmatpush.msra.mxu0 0.0
    %518 = vmatpush.msra.mxu0 0.0
    %519 = vmatpush.msra.mxu0 0.0
    %520 = vmatpush.msra.mxu0 0.0
    %521 = vmatpush.msra.mxu0 %v504
    %522 = vmatmul.f32.gmra.mxu0 %v500
    %v523 = vpop.f32.mrf.mxu0
    %v524 = vadd.f32 %v497, %v523
    %525 = vdwg.mxu0
    %v526 = vmax.f32 %v524, 0.0
    %v527 = vperm.slane %v436, 0
    %v529 = vsel %vm468, %v526, 0
    %v532 = vsel %vm224, %v435, 0
    %534 = vmatpush.msra.mxu0 0.0
    %535 = vmatpush.msra.mxu0 0.0
    %536 = vmatpush.msra.mxu0 0.0
    %537 = vmatpush.msra.mxu0 0.0
    %538 = vmatpush.msra.mxu0 0.0
    %539 = vmatpush.msra.mxu0 0.0
    %540 = vmatpush.msra.mxu0 0.0
    %541 = vmatpush.msra.mxu0 0.0
    %542 = vmatpush.msra.mxu0 0.0
    %543 = vmatpush.msra.mxu0 0.0
    %544 = vmatpush.msra.mxu0 0.0
    %545 = vmatpush.msra.mxu0 0.0
    %546 = vmatpush.msra.mxu0 0.0
    %547 = vmatpush.msra.mxu0 0.0
    %548 = vmatpush.msra.mxu0 0.0
    %549 = vmatpush.msra.mxu0 %v532
    %550 = vmatmul.f32.gmra.mxu0 %v529
    %v551 = vpop.f32.mrf.mxu0
    %v552 = vadd.f32 %v527, %v551
    %553 = vdwg.mxu0
    %555 = vrot.lane.b32.xlu0 %v495, 5
    %v556 = vpop.permute.xlu0 %555
    %559 = vrot.lane.b32.xlu0 %v552, 6
    %v560 = vpop.permute.xlu0 %559
    %v562 = vsel %vm438, %v427, %v556
    %vm563 = vcmask 48128
    %v564 = vsel %vm563, %v562, %v560
    %vm565 = vcmask 89088
    %566 = vst.msk [vmem:[#allocation10] sm:$0xff] %vm565, %v564
    // Predicated region
    $region78: #{tpu_custom_call.1} parent=1 // pred_check
      _
    $region79: #{tpu_custom_call.1} parent=1 // pred_check_branch
      %568 = sbr.rel (0) target = $region81
    $region80: #{tpu_custom_call.1} parent=1 // pred_region
      %570 = vsyncadd [#allocation4], 0
      %s572 = sshll.u32 [#allocation10], 4
      %s573 = int_to_ptr.vmem [resolvable:$true] %s572
      %s574 = sshll.u32 %s15, 4
      %s575 = int_to_ptr.hbm [resolvable:$true] %s574
      %577 = dma.vmem_to_hbm [thread:$0]  %s573, 128, %s575, [#allocation4]
    $region81: #{tpu_custom_call.1} parent=1 // pred_fallthru
      _
    // Predicated region
    $region82: #{tpu_custom_call.1} parent=1 // pred_check
      _
    $region83: #{tpu_custom_call.1} parent=1 // pred_check_branch
      %579 = sbr.rel (0) target = $region85
    $region84: #{tpu_custom_call.1} parent=1 // pred_region
      %581 = dma.done [#allocation4], 128
    $region85: #{tpu_custom_call.1} parent=1 // pred_fallthru
      _
    %582 = vsyncpa [#allocation3], 1
    %583 = vsyncpa [#allocation6], 1
    %584 = vsyncpa [#allocation9], 1
    %585 = vsyncpa [#allocation4], 1

</llo_original>
